<compile_context>
chip_gen: v6e
topology: v6e:2x2x1
jax: 0.10.0
libtpu: 0.0.40
codegen_flags: <defaults>
</compile_context>

<pallas_src>
import functools

import jax
import jax.numpy as jnp
from jax import lax
from jax.experimental import pallas as pl
from jax.experimental.pallas import tpu as pltpu

_MIB = 1024 * 1024


def _supcon_rowblock_kernel(featq_ref, featT_ref, gid_row_ref, colmeta_ref,
                            rs_total_ref, rs_right_ref, cs_ref, *opt_refs,
                            bsz, gate_halves, stop_grad, bsz_lane_aligned):
    tq = featq_ref.shape[0]
    n = featT_ref.shape[1]
    row0 = pl.program_id(0) * tq

    # [TQ, D] x [D, N] bf16 MXU matmul with f32 accumulation.  The 1/temperature scale is
    # pre-folded into the (bf16) LHS in the wrapper, so no per-element multiply here; the
    # RHS is contraction-major (pre-transposed), so no in-kernel transpose is emitted.
    logits_raw = lax.dot_general(featq_ref[...], featT_ref[...],
                                 (((1,), (0,)), ((), ())),
                                 preferred_element_type=jnp.float32)
    logits = logits_raw - jnp.max(logits_raw, axis=1, keepdims=True)

    gid_col = colmeta_ref[0:1, :]                       # (1, n) per-column group ids
    col_ids = colmeta_ref[1:2, :]                       # (1, n) column indices (resident iota)
    row_ids = row0 + lax.broadcasted_iota(jnp.int32, (tq, 1), 0)
    not_diag = row_ids != col_ids                       # logits_mask (ones - eye)
    pos = jnp.logical_and(gid_row_ref[...] == gid_col, not_diag)

    exp_logits = jnp.where(not_diag, jnp.exp(logits), 0.0)
    log_prob = logits - jnp.log(jnp.sum(exp_logits, axis=1, keepdims=True))
    ls = jnp.where(pos, log_prob, 0.0)                  # mask * log_prob

    # Per-row partial sums for this block (mask row-counts are computed in the wrapper).
    rs_total_ref[...] = jnp.sum(ls, axis=1, keepdims=True)
    if bsz_lane_aligned:
        # bsz % 128 == 0: lane-tile-aligned slice, no jnp.where pass.
        rs_right_ref[...] = jnp.sum(ls[:, bsz:], axis=1, keepdims=True)
    else:
        rs_right_ref[...] = jnp.sum(jnp.where(col_ids >= bsz, ls, 0.0),
                                    axis=1, keepdims=True)

    if gate_halves:
        # Every row block lies entirely in the top (row < bsz) or bottom half, so the
        # column partial needs no per-element row mask; for the non-stop_grad path the
        # bottom-block column partials are never consumed, so skip them entirely.
        if stop_grad:
            cs_ref[...] = jnp.sum(ls, axis=0, keepdims=True).reshape(1, 1, n)
        else:
            @pl.when(row0 < bsz)
            def _():
                cs_ref[...] = jnp.sum(ls, axis=0, keepdims=True).reshape(1, 1, n)
    else:
        ls_top = jnp.where(row_ids < bsz, ls, 0.0)
        cs_ref[...] = jnp.sum(ls_top, axis=0, keepdims=True).reshape(1, 1, n)
        if stop_grad:
            (cs_all_ref,) = opt_refs
            cs_all_ref[...] = jnp.sum(ls, axis=0, keepdims=True).reshape(1, 1, n)


def _vmem_capacity_bytes():
    """Physical VMEM of the local TPU generation (conservative default if unknown)."""
    try:
        info = pltpu.get_tpu_info()
        for name in ("vmem_capacity_bytes", "vmem_size_bytes", "vmem_bytes"):
            val = getattr(info, name, None)
            if val:
                return int(val)
    except Exception:
        pass
    return 64 * _MIB  # v7x-sized (safe lower bound for v5e/v6e too)


def _block_footprint_bytes(tq, n, d):
    resident = d * n * 2 + 2 * n * 4          # bf16 [D,N] + int32 [2,N] (single-buffered)
    lhs = 2 * tq * d * 2 + 2 * tq * 4         # double-buffered bf16 row block + gid rows
    work = 9 * tq * n * 4                     # live f32 / mask [TQ,N] temporaries (upper bound)
    outs = 2 * (2 * tq * 128 + 2 * n) * 4     # double-buffered (lane-padded) tiny outputs
    return resident + lhs + work + outs


def _pick_block_rows(n, d, bsz, vmem_budget):
    """Row tile choice: largest preferred tile dividing N that fits the VMEM budget,
    preferring tiles that keep each block inside one half (enables pl.when gating) and
    nb >= 2 (so v7x's two TensorCores both get work).  Returns (block_rows, fits)."""
    def fits(tq):
        return _block_footprint_bytes(tq, n, d) <= vmem_budget

    if n <= 128 or n % 8 != 0:
        return n, fits(n)                      # tiny or ragged N: single full block
    cands = [t for t in (512, 384, 256, 128, 64, 32, 16, 8) if t < n and n % t == 0]
    cands.sort(key=lambda t: (bsz % t != 0, -t))
    for t in cands:
        if fits(t):
            return t, True
    return n, fits(n)


def _resident_spec(shape):
    """Grid-invariant operand: request single buffering (constant index_map => the default
    2-deep pipelining only duplicates it in VMEM)."""
    index_map = lambda i: (0,) * len(shape)
    try:
        return pl.BlockSpec(shape, index_map, pipeline_mode=pl.Buffered(1))
    except Exception:  # older jax without pipeline_mode / Buffered: fall back silently
        return pl.BlockSpec(shape, index_map)


def _supcon_reference(features, adv_weight, labels=None, mask=None, stop_grad=False,
                      stop_grad_sd=-1.0, temperature=0.07, base_temperature=0.07):
    """Pure-JAX transcription of ori_SupConLoss.forward (contrast_mode='all'),
    including the PyTorch view-aliasing of ac_square when stop_grad=False."""
    bsz, n_views = features.shape[0], features.shape[1]
    feats = features.reshape(bsz, n_views, -1).astype(jnp.float32)
    n = bsz * n_views
    if labels is None and mask is None:
        base = jnp.eye(bsz, dtype=jnp.float32)
    elif labels is not None:
        labels = jnp.asarray(labels).reshape(-1, 1)
        base = (labels == labels.T).astype(jnp.float32)
    else:
        base = jnp.asarray(mask, jnp.float32)
    cf = jnp.transpose(feats, (1, 0, 2)).reshape(n, -1)
    adc = (cf @ cf.T) / temperature
    logits = adc - jnp.max(adc, axis=1, keepdims=True)
    logits_mask = 1.0 - jnp.eye(n, dtype=jnp.float32)
    m = jnp.tile(base, (n_views, n_views)) * logits_mask
    exp_logits = jnp.exp(logits) * logits_mask
    log_prob = logits - jnp.log(exp_logits.sum(1, keepdims=True))
    ls = m * log_prob
    mix = ls
    if stop_grad:
        ac = stop_grad_sd * ls[bsz:, :bsz].T + (1.0 - stop_grad_sd) * ls[:bsz, bsz:]
        mix = mix.at[:bsz, bsz:].set(ac * adv_weight)
        mix = mix.at[bsz:, :bsz].set(ac.T * adv_weight)
    else:
        # In PyTorch, ac_square is a *view* of mix_square; after the first slice write it
        # already holds adv_weight * ls[:bsz, bsz:], so the second write uses adv_weight^2.
        ac = ls[:bsz, bsz:]
        mix = mix.at[:bsz, bsz:].set(ac * adv_weight)
        ac_after_write = mix[:bsz, bsz:]
        mix = mix.at[bsz:, :bsz].set(ac_after_write.T * adv_weight)
    mean_log_prob_pos = mix.sum(1) / m.sum(1)
    loss = -(temperature / base_temperature) * mean_log_prob_pos
    return loss.reshape(n_views, bsz).mean()


def supcon_loss(features, params, labels=None, mask=None, stop_grad=False,
                stop_grad_sd=-1.0, temperature=0.07, contrast_mode='all',
                base_temperature=0.07):
    """JAX/Pallas forward of ori_SupConLoss (contrast_mode='all')."""
    if contrast_mode != 'all':
        # TODO(synk): contrast_mode='one' (single-anchor) path is not implemented.
        raise ValueError("only contrast_mode='all' is implemented")
    _, _, adv_weight, _ = params

    if features.ndim < 3:
        raise ValueError('`features` needs to be [bsz, n_views, ...]')
    bsz, n_views = features.shape[0], features.shape[1]
    features = features.reshape(bsz, n_views, -1).astype(jnp.float32)
    d = features.shape[-1]
    n = bsz * n_views

    if labels is not None and mask is not None:
        raise ValueError('Cannot define both `labels` and `mask`')
    if mask is not None:
        # TODO(synk): arbitrary (possibly asymmetric) [bsz,bsz] masks cannot be rebuilt
        # from a group-id vector; use the pure-JAX path for that case.
        return _supcon_reference(features, adv_weight, labels=None, mask=mask,
                                 stop_grad=stop_grad, stop_grad_sd=stop_grad_sd,
                                 temperature=temperature,
                                 base_temperature=base_temperature)
    if labels is None:
        gid = jnp.arange(bsz, dtype=jnp.int32)            # SimCLR eye-mask case
    else:
        labels = jnp.asarray(labels).reshape(-1)
        if labels.shape[0] != bsz:
            raise ValueError('Num of labels does not match num of features')
        gid = labels.astype(jnp.int32)
    gid_full = jnp.tile(gid, n_views)                     # row k <-> sample (k % bsz)

    # contrast_feature == torch.cat(torch.unbind(features, dim=1), dim=0)
    cf = jnp.transpose(features, (1, 0, 2)).reshape(n, d)
    inv_temperature = 1.0 / temperature                   # stays outside the kernel (no bake)
    cf_lhs = (cf * inv_temperature).astype(jnp.bfloat16)  # pre-scaled bf16 MXU LHS
    cf_rhsT = cf.astype(jnp.bfloat16).T                   # [D, N] resident bf16 RHS

    # Generation-aware VMEM budget and row-tile choice.
    vmem_cap = _vmem_capacity_bytes()
    vmem_limit = max(32 * _MIB, min(vmem_cap - 16 * _MIB, 112 * _MIB))
    block_rows, fits = _pick_block_rows(n, d, bsz, vmem_limit - 4 * _MIB)
    if not fits:
        # TODO(synk): column-tiled (flash-style online-softmax) variant for problems where
        # the [D, N] operand cannot stay resident in VMEM; fall back to pure JAX for now.
        return _supcon_reference(features, adv_weight, labels=labels, mask=None,
                                 stop_grad=stop_grad, stop_grad_sd=stop_grad_sd,
                                 temperature=temperature,
                                 base_temperature=base_temperature)

    nb = n // block_rows
    gate_halves = (bsz % block_rows == 0)                 # each block inside one half
    bsz_lane_aligned = (bsz % 128 == 0) and (bsz < n)

    colmeta = jnp.stack([gid_full, jnp.arange(n, dtype=jnp.int32)], axis=0)  # (2, n) int32

    kernel = functools.partial(
        _supcon_rowblock_kernel, bsz=bsz, gate_halves=gate_halves,
        stop_grad=bool(stop_grad), bsz_lane_aligned=bsz_lane_aligned)

    row_spec = pl.BlockSpec((block_rows, 1), lambda i: (i, 0))
    cs_spec = pl.BlockSpec((1, 1, n), lambda i: (i, 0, 0))
    in_specs = [
        pl.BlockSpec((block_rows, d), lambda i: (i, 0)),  # scaled bf16 row block
        _resident_spec((d, n)),                           # resident transposed features
        pl.BlockSpec((block_rows, 1), lambda i: (i, 0)),  # per-row group ids
        _resident_spec((2, n)),                           # [gid_col ; col index] (resident)
    ]
    out_shape = [jax.ShapeDtypeStruct((n, 1), jnp.float32),      # row sums of ls
                 jax.ShapeDtypeStruct((n, 1), jnp.float32),      # right-half row sums
                 jax.ShapeDtypeStruct((nb, 1, n), jnp.float32)]  # per-block column partials
    out_specs = [row_spec, row_spec, cs_spec]
    emit_cs_all = (not gate_halves) and stop_grad
    if emit_cs_all:
        out_shape.append(jax.ShapeDtypeStruct((nb, 1, n), jnp.float32))  # all-row partials
        out_specs.append(cs_spec)

    outs = pl.pallas_call(
        kernel,
        out_shape=tuple(out_shape),
        grid=(nb,),
        in_specs=in_specs,
        out_specs=tuple(out_specs),
        compiler_params=pltpu.CompilerParams(
            dimension_semantics=("parallel",),
            vmem_limit_bytes=int(vmem_limit)),
    )(cf_lhs, cf_rhsT, gid_full.reshape(n, 1), colmeta)

    rs_total = outs[0][:, 0]
    rs_right = outs[1][:, 0]
    rs_left = rs_total - rs_right
    cs_blocks = outs[2][:, 0, :]

    if gate_halves:
        nb_top = bsz // block_rows
        cs_top = jnp.sum(cs_blocks[:nb_top], axis=0)
        cs_bot = jnp.sum(cs_blocks[nb_top:], axis=0) if stop_grad else None
    else:
        cs_top = jnp.sum(cs_blocks, axis=0)
        cs_bot = (jnp.sum(outs[3][:, 0, :], axis=0) - cs_top) if stop_grad else None

    # Positive counts (mask.sum(1)) depend only on the labels: O(bsz^2) wrapper math
    # instead of an in-kernel [TQ,N] pass + extra output.
    same = gid[:, None] == gid[None, :]
    msum = jnp.tile((n_views * jnp.sum(same, axis=1) - 1).astype(jnp.float32), n_views)

    adv_w = jnp.asarray(adv_weight, jnp.float32)
    if stop_grad:
        sd = jnp.asarray(stop_grad_sd, jnp.float32)
        top_sum = rs_left + adv_w * (sd * cs_bot + (1.0 - sd) * rs_right)
        bot_sum = rs_right + adv_w * (sd * rs_left + (1.0 - sd) * cs_top)
    else:
        # PyTorch aliasing: bottom-left block ends up scaled by adv_weight**2 (see header).
        top_sum = rs_left + adv_w * rs_right
        bot_sum = rs_right + (adv_w * adv_w) * cs_top

    is_top = jnp.arange(n) < bsz
    mix_rowsum = jnp.where(is_top, top_sum, bot_sum)
    # NOTE: rows with no positives divide by zero (inf/nan) — same as the PyTorch original.
    mean_log_prob_pos = mix_rowsum / msum
    # loss.view(anchor_count, batch_size).mean() == mean over all N anchors
    return -(temperature / base_temperature) * jnp.mean(mean_log_prob_pos)
    # TODO(synk): forward only; no custom VJP is defined for the Pallas call (training
    # would need a hand-written backward or a pure-JAX fallback under jax.grad).


if __name__ == "__main__":
    key = jax.random.PRNGKey(0)
    params = (None, None, 0.5, None)   # params = (_, _, adv_weight, _)

    # ---- small case: bsz=8, n_views=2, D=32 (single block, non-gated path) ----
    bsz, n_views, feat_dim = 8, 2, 32
    k1, k2 = jax.random.split(key)
    feats = jax.random.normal(k1, (bsz, n_views, feat_dim), dtype=jnp.float32)
    feats = feats / jnp.linalg.norm(feats, axis=-1, keepdims=True)
    # Kernel consumes bf16 features (MXU fast path): compare tightly against a reference
    # fed the same bf16-rounded values, and loosely against the full-f32 reference.
    feats_bf = feats.astype(jnp.bfloat16).astype(jnp.float32)

    got = jax.block_until_ready(supcon_loss(feats, params))
    want = _supcon_reference(feats_bf, 0.5)
    want_f32 = _supcon_reference(feats, 0.5)
    assert jnp.allclose(got, want, atol=1e-2, rtol=1e-2), (float(got), float(want))
    assert jnp.allclose(got, want_f32, atol=5e-2, rtol=5e-2), (float(got), float(want_f32))

    labels = jnp.array([0, 1, 2, 3, 0, 1, 2, 3], dtype=jnp.int32)
    got_l = jax.block_until_ready(supcon_loss(feats, params, labels=labels))
    want_l = _supcon_reference(feats_bf, 0.5, labels=labels)
    assert jnp.allclose(got_l, want_l, atol=1e-2, rtol=1e-2), (float(got_l), float(want_l))

    got_sg = jax.block_until_ready(
        supcon_loss(feats, params, stop_grad=True, stop_grad_sd=0.3))
    want_sg = _supcon_reference(feats_bf, 0.5, stop_grad=True, stop_grad_sd=0.3)
    assert jnp.allclose(got_sg, want_sg, atol=1e-2, rtol=1e-2), (float(got_sg), float(want_sg))

    # ---- larger case: bsz=512, n_views=2, D=64 (multi-block, gated + lane-aligned path) ----
    bszL, dL = 512, 64
    featsL = jax.random.normal(k2, (bszL, 2, dL), dtype=jnp.float32)
    featsL = featsL / jnp.linalg.norm(featsL, axis=-1, keepdims=True)
    featsL_bf = featsL.astype(jnp.bfloat16).astype(jnp.float32)

    gotL = jax.block_until_ready(supcon_loss(featsL, params))
    wantL = _supcon_reference(featsL_bf, 0.5)
    assert jnp.allclose(gotL, wantL, atol=2e-2, rtol=2e-2), (float(gotL), float(wantL))

    labelsL = (jnp.arange(bszL) % 4).astype(jnp.int32)
    gotL_sg = jax.block_until_ready(
        supcon_loss(featsL, params, labels=labelsL, stop_grad=True, stop_grad_sd=0.3))
    wantL_sg = _supcon_reference(featsL_bf, 0.5, labels=labelsL,
                                 stop_grad=True, stop_grad_sd=0.3)
    assert jnp.allclose(gotL_sg, wantL_sg, atol=2e-2, rtol=2e-2), (
        float(gotL_sg), float(wantL_sg))

    print("KERNEL_OK")
</pallas_src>

<mosaic_0001>
module attributes {stable_mosaic.version = 11 : i64} {
  func.func @_supcon_rowblock_kernel(%arg0: i32, %arg1: memref<16x32xbf16, #tpu.memory_space<vmem>>, %arg2: memref<32x16xbf16, #tpu.memory_space<vmem>>, %arg3: memref<16x1xi32, #tpu.memory_space<vmem>>, %arg4: memref<2x16xi32, #tpu.memory_space<vmem>>, %arg5: memref<16x1xf32, #tpu.memory_space<vmem>>, %arg6: memref<16x1xf32, #tpu.memory_space<vmem>>, %arg7: memref<1x1x16xf32, #tpu.memory_space<vmem>>) attributes {dimension_semantics = [#tpu.dimension_semantics<parallel>], iteration_bounds = array<i64: 1>, scalar_prefetch = 0 : i64, scratch_operands = 0 : i64, tpu.core_type = #tpu.core_type<tc>, window_params = [{transform_indices = @transform_0, window_bounds = array<i64: 16, 32>}, {pipeline_mode = #tpu.pipeline_mode<synchronous>, transform_indices = @transform_1, window_bounds = array<i64: 32, 16>}, {transform_indices = @transform_2, window_bounds = array<i64: 16, 1>}, {pipeline_mode = #tpu.pipeline_mode<synchronous>, transform_indices = @transform_3, window_bounds = array<i64: 2, 16>}, {transform_indices = @transform_4, window_bounds = array<i64: 16, 1>}, {transform_indices = @transform_5, window_bounds = array<i64: 16, 1>}, {transform_indices = @transform_6, window_bounds = array<i64: 1, 1, 16>}]} {
    %c16_i32 = arith.constant 16 : i32
    %0 = arith.muli %arg0, %c16_i32 : i32
    %c0 = arith.constant 0 : index
    %c0_0 = arith.constant 0 : index
    %1 = vector.load %arg1[%c0, %c0_0] : memref<16x32xbf16, #tpu.memory_space<vmem>>, vector<16x32xbf16>
    %c0_1 = arith.constant 0 : index
    %c0_2 = arith.constant 0 : index
    %2 = vector.load %arg2[%c0_1, %c0_2] : memref<32x16xbf16, #tpu.memory_space<vmem>>, vector<32x16xbf16>
    %cst = arith.constant dense<0.000000e+00> : vector<16x16xf32>
    %3 = tpu.matmul %1, %2, %cst {dimension_numbers = #tpu.dot_dimension_numbers<[1], [0], [0], [1], [0, 0, 1, 1], [], []>} : vector<16x32xbf16>, vector<32x16xbf16>, vector<16x16xf32> -> vector<16x16xf32>
    %cst_3 = arith.constant dense<0xFF800000> : vector<16xf32>
    %4 = vector.multi_reduction <maximumf>, %3, %cst_3 [1] : vector<16x16xf32> to vector<16xf32>
    %5 = vector.shape_cast %4 : vector<16xf32> to vector<16x1xf32>
    %6 = vector.broadcast %5 : vector<16x1xf32> to vector<16x16xf32>
    %7 = arith.subf %3, %6 : vector<16x16xf32>
    %c0_4 = arith.constant 0 : index
    %c0_5 = arith.constant 0 : index
    %8 = vector.load %arg4[%c0_4, %c0_5] : memref<2x16xi32, #tpu.memory_space<vmem>>, vector<1x16xi32>
    %c1 = arith.constant 1 : index
    %c0_6 = arith.constant 0 : index
    %9 = vector.load %arg4[%c1, %c0_6] : memref<2x16xi32, #tpu.memory_space<vmem>>, vector<1x16xi32>
    %10 = tpu.iota {dimensions = array<i32: 0>} : vector<16x1xi32>
    %11 = vector.broadcast %0 : i32 to vector<16x1xi32>
    %12 = arith.addi %11, %10 : vector<16x1xi32>
    %13 = vector.broadcast %12 : vector<16x1xi32> to vector<16x16xi32>
    %14 = vector.broadcast %9 : vector<1x16xi32> to vector<16x16xi32>
    %15 = arith.cmpi ne, %13, %14 : vector<16x16xi32>
    %c0_7 = arith.constant 0 : index
    %c0_8 = arith.constant 0 : index
    %16 = vector.load %arg3[%c0_7, %c0_8] : memref<16x1xi32, #tpu.memory_space<vmem>>, vector<16x1xi32>
    %17 = vector.broadcast %16 : vector<16x1xi32> to vector<16x16xi32>
    %18 = vector.broadcast %8 : vector<1x16xi32> to vector<16x16xi32>
    %19 = arith.cmpi eq, %17, %18 : vector<16x16xi32>
    %20 = arith.andi %19, %15 : vector<16x16xi1>
    %21 = math.exp %7 : vector<16x16xf32>
    %cst_9 = arith.constant 0.000000e+00 : f32
    %22 = vector.broadcast %cst_9 : f32 to vector<16x16xf32>
    %23 = arith.select %15, %21, %22 : vector<16x16xi1>, vector<16x16xf32>
    %cst_10 = arith.constant dense<0.000000e+00> : vector<16xf32>
    %24 = vector.multi_reduction <add>, %23, %cst_10 [1] : vector<16x16xf32> to vector<16xf32>
    %25 = vector.shape_cast %24 : vector<16xf32> to vector<16x1xf32>
    %26 = math.log %25 : vector<16x1xf32>
    %27 = vector.broadcast %26 : vector<16x1xf32> to vector<16x16xf32>
    %28 = arith.subf %7, %27 : vector<16x16xf32>
    %cst_11 = arith.constant 0.000000e+00 : f32
    %29 = vector.broadcast %cst_11 : f32 to vector<16x16xf32>
    %30 = arith.select %20, %28, %29 : vector<16x16xi1>, vector<16x16xf32>
    %cst_12 = arith.constant dense<0.000000e+00> : vector<16xf32>
    %31 = vector.multi_reduction <add>, %30, %cst_12 [1] : vector<16x16xf32> to vector<16xf32>
    %32 = vector.shape_cast %31 : vector<16xf32> to vector<16x1xf32>
    %c0_13 = arith.constant 0 : index
    %c0_14 = arith.constant 0 : index
    %33 = vector.load %arg5[%c0_13, %c0_14] : memref<16x1xf32, #tpu.memory_space<vmem>>, vector<16x1xf32>
    tpu.vector_store %arg5[%c0_13, %c0_14], %32 {strides = array<i32>} : memref<16x1xf32, #tpu.memory_space<vmem>>, vector<16x1xf32>,
    %c8_i32 = arith.constant 8 : i32
    %34 = vector.broadcast %c8_i32 : i32 to vector<1x16xi32>
    %35 = arith.cmpi sge, %9, %34 : vector<1x16xi32>
    %cst_15 = arith.constant 0.000000e+00 : f32
    %36 = vector.shape_cast %35 : vector<1x16xi1> to vector<1x16xi1>
    %37 = vector.broadcast %36 : vector<1x16xi1> to vector<16x16xi1>
    %38 = vector.broadcast %cst_15 : f32 to vector<16x16xf32>
    %39 = arith.select %37, %30, %38 : vector<16x16xi1>, vector<16x16xf32>
    %cst_16 = arith.constant dense<0.000000e+00> : vector<16xf32>
    %40 = vector.multi_reduction <add>, %39, %cst_16 [1] : vector<16x16xf32> to vector<16xf32>
    %41 = vector.shape_cast %40 : vector<16xf32> to vector<16x1xf32>
    %c0_17 = arith.constant 0 : index
    %c0_18 = arith.constant 0 : index
    %42 = vector.load %arg6[%c0_17, %c0_18] : memref<16x1xf32, #tpu.memory_space<vmem>>, vector<16x1xf32>
    tpu.vector_store %arg6[%c0_17, %c0_18], %41 {strides = array<i32>} : memref<16x1xf32, #tpu.memory_space<vmem>>, vector<16x1xf32>,
    %c8_i32_19 = arith.constant 8 : i32
    %43 = vector.broadcast %c8_i32_19 : i32 to vector<16x1xi32>
    %44 = arith.cmpi slt, %12, %43 : vector<16x1xi32>
    %cst_20 = arith.constant 0.000000e+00 : f32
    %45 = vector.shape_cast %44 : vector<16x1xi1> to vector<16x1xi1>
    %46 = vector.broadcast %45 : vector<16x1xi1> to vector<16x16xi1>
    %47 = vector.broadcast %cst_20 : f32 to vector<16x16xf32>
    %48 = arith.select %46, %30, %47 : vector<16x16xi1>, vector<16x16xf32>
    %cst_21 = arith.constant dense<0.000000e+00> : vector<16xf32>
    %49 = vector.multi_reduction <add>, %48, %cst_21 [0] : vector<16x16xf32> to vector<16xf32>
    %50 = vector.shape_cast %49 : vector<16xf32> to vector<1x16xf32>
    %51 = vector.shape_cast %50 : vector<1x16xf32> to vector<1x1x16xf32>
    %c0_22 = arith.constant 0 : index
    %c0_23 = arith.constant 0 : index
    %c0_24 = arith.constant 0 : index
    %52 = vector.load %arg7[%c0_22, %c0_23, %c0_24] : memref<1x1x16xf32, #tpu.memory_space<vmem>>, vector<1x1x16xf32>
    tpu.vector_store %arg7[%c0_22, %c0_23, %c0_24], %51 {strides = array<i32>} : memref<1x1x16xf32, #tpu.memory_space<vmem>>, vector<1x1x16xf32>,
    return
  }
  func.func @transform_0(%arg0: i32) -> (i32, i32) {
    %c0_i32 = arith.constant 0 : i32
    %c0_i32_0 = arith.constant 0 : i32
    return %arg0, %c0_i32 : i32, i32
  }
  func.func @transform_1(%arg0: i32) -> (i32, i32) {
    %c0_i32 = arith.constant 0 : i32
    %c0_i32_0 = arith.constant 0 : i32
    %c0_i32_1 = arith.constant 0 : i32
    return %c0_i32, %c0_i32_0 : i32, i32
  }
  func.func @transform_2(%arg0: i32) -> (i32, i32) {
    %c0_i32 = arith.constant 0 : i32
    %c0_i32_0 = arith.constant 0 : i32
    return %arg0, %c0_i32 : i32, i32
  }
  func.func @transform_3(%arg0: i32) -> (i32, i32) {
    %c0_i32 = arith.constant 0 : i32
    %c0_i32_0 = arith.constant 0 : i32
    %c0_i32_1 = arith.constant 0 : i32
    return %c0_i32, %c0_i32_0 : i32, i32
  }
  func.func @transform_4(%arg0: i32) -> (i32, i32) {
    %c0_i32 = arith.constant 0 : i32
    %c0_i32_0 = arith.constant 0 : i32
    return %arg0, %c0_i32 : i32, i32
  }
  func.func @transform_5(%arg0: i32) -> (i32, i32) {
    %c0_i32 = arith.constant 0 : i32
    %c0_i32_0 = arith.constant 0 : i32
    return %arg0, %c0_i32 : i32, i32
  }
  func.func @transform_6(%arg0: i32) -> (i32, i32, i32) {
    %c0_i32 = arith.constant 0 : i32
    %c0_i32_0 = arith.constant 0 : i32
    %c0_i32_1 = arith.constant 0 : i32
    return %arg0, %c0_i32, %c0_i32_0 : i32, i32, i32
  }
}

</mosaic_0001>

<llo_original>
// kernel: tpu_custom_call.1
$region0: #{tpu_custom_call.1}
  #allocation0 [shape = 'u32[]', space=smem, size = 0x4, offset = 0x4, fixed_abs, tag = 'smem constant byte address 0x4 - core index']
  #allocation1 [shape = 'u32[144,128]{1,0:T(1,128)}', space=vmem, size = 0x12000, scoped, tag = 'internal scratch']
  %s0 = inlined_call_operand.vmem [shape: bf16[16,32], index: 0, kind: input, shape index: {}]
  %s1 = inlined_call_operand.vmem [shape: bf16[32,16], index: 1, kind: input, shape index: {}]
  %s2 = inlined_call_operand.vmem [shape: s32[16,1], index: 2, kind: input, shape index: {}]
  %s3 = inlined_call_operand.vmem [shape: s32[2,16], index: 3, kind: input, shape index: {}]
  %s4 = inlined_call_operand.vmem [shape: f32[16,1], index: 4, kind: output, shape index: {0}]
  %s5 = inlined_call_operand.vmem [shape: f32[16,1], index: 5, kind: output, shape index: {1}]
  %s6 = inlined_call_operand.hbm [shape: f32[1,1,16], index: 6, kind: output, shape index: {2}]
  %7 = xla_tuple %s4, %s5, %s6
  %s8 = sld [smem:[#allocation0]]
  $region42: #{tpu_custom_call.1} parent=0
    _
  %s10 = ssub.s32 1, %s8
  %s11 = scalar_select 0, %s10, %s8
  $region1: #{tpu_custom_call.1} parent=0
    #allocation2 [shape = 'u8[512]{0}', space=vmem, size = 0x400, scoped, tag = 'output window, operand 2, single buffered']
    #allocation3 [shape = 's32[1]{0}', space=sflag, size = 0x4, scoped, tag = 'scoped memory for tpu_custom_call.1']
    %12 = vsyncpa [#allocation3], 0
    // Predicated region
    $region2: #{tpu_custom_call.1} parent=1 // pred_check
      _
    $region3: #{tpu_custom_call.1} parent=1 // pred_check_branch
      %14 = sbr.rel (0) target = $region5
    $region4: #{tpu_custom_call.1} parent=1 // pred_region
      _
    $region5: #{tpu_custom_call.1} parent=1 // pred_fallthru
      _
    // Predicated region
    $region6: #{tpu_custom_call.1} parent=1 // pred_check
      _
    $region7: #{tpu_custom_call.1} parent=1 // pred_check_branch
      %16 = sbr.rel (0) target = $region9
    $region8: #{tpu_custom_call.1} parent=1 // pred_region
      _
    $region9: #{tpu_custom_call.1} parent=1 // pred_fallthru
      _
    // Predicated region
    $region10: #{tpu_custom_call.1} parent=1 // pred_check
      _
    $region11: #{tpu_custom_call.1} parent=1 // pred_check_branch
      %18 = sbr.rel (0) target = $region13
    $region12: #{tpu_custom_call.1} parent=1 // pred_region
      _
    $region13: #{tpu_custom_call.1} parent=1 // pred_fallthru
      _
    // Predicated region
    $region14: #{tpu_custom_call.1} parent=1 // pred_check
      _
    $region15: #{tpu_custom_call.1} parent=1 // pred_check_branch
      %20 = sbr.rel (0) target = $region17
    $region16: #{tpu_custom_call.1} parent=1 // pred_region
      _
    $region17: #{tpu_custom_call.1} parent=1 // pred_fallthru
      _
    %s22 = smul.u32 0, 16
    %v23 = vld [vmem:[%s0] sm:$0xf]
    %v24 = vld [vmem:[%s0 + $0x4] sm:$0xf]
    %v25 = vld [vmem:[%s1] sm:$0xf]
    %v26 = vld [vmem:[%s1 + $0x4] sm:$0xf]
    %v27 = vld [vmem:[%s1 + $0x8] sm:$0xf]
    %v28 = vld [vmem:[%s1 + $0xc] sm:$0xf]
    %v31 = vunpack.c.l.b16 %v23
    %v32 = vunpack.c.l.b16 %v24
    %v33 = vpack.c.b16 %v32, %v31
    %v38 = vunpack.c.l.b16 %v25
    %v39 = vunpack.c.l.b16 %v26
    %v40 = vunpack.c.l.b16 %v27
    %v41 = vunpack.c.l.b16 %v28
    %v42 = vpack.c.b16 %v39, %v38
    %v43 = vpack.c.b16 %v41, %v40
    %vm46 = vcmask 261120
    %v48 = vsel %vm46, %v33, 0
    %50 = vmatprep.subr.bf16.mxu0 0
    %51 = vmatpush1.bf16.msra.mxu0 0
    %52 = vmatprep.subr.bf16.mxu0 0
    %53 = vmatpush1.bf16.msra.mxu0 0
    %54 = vmatprep.subr.bf16.mxu0 0
    %55 = vmatpush1.bf16.msra.mxu0 0
    %56 = vmatprep.subr.bf16.mxu0 0
    %57 = vmatpush1.bf16.msra.mxu0 0
    %58 = vmatprep.subr.bf16.mxu0 0
    %59 = vmatpush1.bf16.msra.mxu0 0
    %60 = vmatprep.subr.bf16.mxu0 0
    %61 = vmatpush1.bf16.msra.mxu0 0
    %62 = vmatprep.subr.bf16.mxu0 0
    %63 = vmatpush1.bf16.msra.mxu0 %v43
    %64 = vmatprep.subr.bf16.mxu0 0
    %65 = vmatpush1.bf16.msra.mxu0 %v42
    %66 = vmatprep.subr.bf16.mxu0 0
    %67 = vmatpush2.bf16.msra.mxu0 0
    %68 = vmatprep.subr.bf16.mxu0 0
    %69 = vmatpush2.bf16.msra.mxu0 0
    %70 = vmatprep.subr.bf16.mxu0 0
    %71 = vmatpush2.bf16.msra.mxu0 0
    %72 = vmatprep.subr.bf16.mxu0 0
    %73 = vmatpush2.bf16.msra.mxu0 0
    %74 = vmatprep.subr.bf16.mxu0 0
    %75 = vmatpush2.bf16.msra.mxu0 0
    %76 = vmatprep.subr.bf16.mxu0 0
    %77 = vmatpush2.bf16.msra.mxu0 0
    %78 = vmatprep.subr.bf16.mxu0 0
    %79 = vmatpush2.bf16.msra.mxu0 0
    %80 = vmatprep.subr.bf16.mxu0 0
    %81 = vmatpush2.bf16.msra.mxu0 0
    %82 = vmatprep.mubr.bf16.mxu0 0
    %83 = vmatmul.mubr.bf16.gmra.mxu0 %v48
    %v84 = vpop.f32.mrf.mxu0
    %v85 = vadd.f32 0.0, %v84
    %v86 = vpop.f32.mrf.mxu0
    %v87 = vpop.f32.mrf.mxu0
    %v88 = vadd.f32 0.0, %v87
    %v89 = vpop.f32.mrf.mxu0
    %90 = vdwg.mxu0
    %vm91 = vcmask 130048
    %v92 = vsel %vm91, %v85, -inf
    %93 = vmax.xlane.f32.xlu0 %v92
    %v94 = vpop.xlane.xlu0 %93
    %v95 = vsel %vm91, %v88, -inf
    %96 = vmax.xlane.f32.xlu0 %v95
    %v97 = vpop.xlane.xlu0 %96
    %v98 = vsub.f32 %v85, %v94
    %v99 = vsub.f32 %v88, %v97
    %v100 = vld [vmem:[%s3] sm:$0x1]
    %v101 = vld [vmem:[%s3 + $0x1] sm:$0x1]
    %v102 = vlaneseq
    %v103 = vshrl.u32 %v102, 7
    %v104 = vadd.s32 %v103, 8
    %v105 = vstv %s22
    %v106 = vadd.s32 %v105, %v103
    %v107 = vadd.s32 %v105, %v104
    %v108 = vlaneseq
    %v109 = vshrl.u32 %v108, 7
    %v110 = vsub.s32 0, %v109
    %v111 = vrot.slane %v101, %v110
    %vm112 = vcmp.ne.s32.totalorder %v106, %v111
    %vm113 = vcmp.ne.s32.totalorder %v107, %v111
    %v114 = vld [vmem:[%s2] sm:$0xff]
    %v115 = vld [vmem:[%s2 + $0x8] sm:$0xff]
    %116 = vset.pattern.permute.xlu0 0
    %117 = vperm.xlu0 %116, %v114
    %v118 = vpop.permute.xlu0 %117
    %119 = vset.pattern.permute.xlu0 0
    %120 = vperm.xlu0 %119, %v115
    %v121 = vpop.permute.xlu0 %120
    %v122 = vlaneseq
    %v123 = vshrl.u32 %v122, 7
    %v124 = vsub.s32 0, %v123
    %v125 = vrot.slane %v100, %v124
    %vm126 = vcmp.eq.s32.totalorder %v118, %v125
    %vm127 = vcmp.eq.s32.totalorder %v121, %v125
    %vm128 = vmand %vm126, %vm112
    %vm129 = vmand %vm127, %vm113
    %v130 = vmul.f32 %v98, 1.442695
    %v131 = vpow.pop %v130
    %v132 = vmul.f32 %v99, 1.442695
    %v133 = vpow.pop %v132
    %v134 = vsel %vm112, %v131, 0.0
    %v135 = vsel %vm113, %v133, 0.0
    %v136 = vsel %vm91, %v134, 0.0
    %137 = vadd.xlane.f32.xlu0 %v136
    %v138 = vpop.xlane.xlu0 %137
    %v139 = vsel %vm91, %v135, 0.0
    %140 = vadd.xlane.f32.xlu0 %v139
    %v141 = vpop.xlane.xlu0 %140
    %v142 = vlog2.pop %v138
    %v143 = vmul.f32 %v142, 0.6931472
    %v144 = vlog2.pop %v141
    %v145 = vmul.f32 %v144, 0.6931472
    %v146 = vsub.f32 %v98, %v143
    %v147 = vsub.f32 %v99, %v145
    %v148 = vsel %vm128, %v146, 0.0
    %v149 = vsel %vm129, %v147, 0.0
    %v150 = vsel %vm91, %v148, 0.0
    %151 = vadd.xlane.f32.xlu0 %v150
    %v152 = vpop.xlane.xlu0 %151
    %v153 = vsel %vm91, %v149, 0.0
    %154 = vadd.xlane.f32.xlu0 %v153
    %v155 = vpop.xlane.xlu0 %154
    %vm156 = vcmask 7168
    %157 = vst.msk [vmem:[%s4] sm:$0xff] %vm156, %v152
    %158 = vst.msk [vmem:[%s4 + $0x8] sm:$0xff] %vm156, %v155
    %vm159 = vcmp.ge.s32.totalorder %v101, 8
    %v160 = vsel %vm159, 1, 0
    %v161 = vlaneseq
    %v162 = vshrl.u32 %v161, 7
    %v163 = vsub.s32 0, %v162
    %v164 = vrot.slane %v160, %v163
    %vm165 = vcmp.eq.s32.totalorder %v164, 1
    %v166 = vsel %vm165, %v148, 0.0
    %v167 = vsel %vm165, %v149, 0.0
    %v168 = vsel %vm91, %v166, 0.0
    %169 = vadd.xlane.f32.xlu0 %v168
    %v170 = vpop.xlane.xlu0 %169
    %v171 = vsel %vm91, %v167, 0.0
    %172 = vadd.xlane.f32.xlu0 %v171
    %v173 = vpop.xlane.xlu0 %172
    %174 = vst.msk [vmem:[%s5] sm:$0xff] %vm156, %v170
    %175 = vst.msk [vmem:[%s5 + $0x8] sm:$0xff] %vm156, %v173
    %vm176 = vcmp.lt.s32.totalorder %v106, 8
    %vm177 = vcmp.lt.s32.totalorder %v107, 8
    %v178 = vsel %vm176, 1, 0
    %v179 = vsel %vm177, 1, 0
    %vm180 = vcmp.eq.s32.totalorder %v178, 1
    %vm181 = vcmp.eq.s32.totalorder %v179, 1
    %v182 = vsel %vm180, %v148, 0.0
    %v183 = vsel %vm181, %v149, 0.0
    %v184 = vsel %vm91, %v182, 0.0
    %v185 = vsel %vm91, %v183, 0.0
    %v186 = vadd.f32 %v184, %v185
    %v187 = vrot.slane %v186, 4
    %v188 = vadd.f32 %v186, %v187
    %v189 = vrot.slane %v188, 2
    %v190 = vadd.f32 %v188, %v189
    %v191 = vrot.slane %v190, 1
    %v192 = vadd.f32 %v190, %v191
    %vm193 = vcmask 122880
    %194 = vst.msk [vmem:[#allocation2] sm:$0x1] %vm193, %v192
    // Predicated region
    $region18: #{tpu_custom_call.1} parent=1 // pred_check
      _
    $region19: #{tpu_custom_call.1} parent=1 // pred_check_branch
      %196 = sbr.rel (0) target = $region21
    $region20: #{tpu_custom_call.1} parent=1 // pred_region
      _
    $region21: #{tpu_custom_call.1} parent=1 // pred_fallthru
      _
    // Predicated region
    $region22: #{tpu_custom_call.1} parent=1 // pred_check
      _
    $region23: #{tpu_custom_call.1} parent=1 // pred_check_branch
      %198 = sbr.rel (0) target = $region25
    $region24: #{tpu_custom_call.1} parent=1 // pred_region
      _
    $region25: #{tpu_custom_call.1} parent=1 // pred_fallthru
      _
    // Predicated region
    $region26: #{tpu_custom_call.1} parent=1 // pred_check
      _
    $region27: #{tpu_custom_call.1} parent=1 // pred_check_branch
      %200 = sbr.rel (0) target = $region29
    $region28: #{tpu_custom_call.1} parent=1 // pred_region
      %s202 = ssub.s32 16, 16
      %203 = vsyncadd [#allocation3], %s202
      %s205 = sshll.u32 [#allocation2], 4
      %s206 = int_to_ptr.vmem [resolvable:$true] %s205
      %208 = dma.vmem_to_hbm [thread:$0]  %s206, 16, %s6, [#allocation3]
    $region29: #{tpu_custom_call.1} parent=1 // pred_fallthru
      _
    // Predicated region
    $region30: #{tpu_custom_call.1} parent=1 // pred_check
      _
    $region31: #{tpu_custom_call.1} parent=1 // pred_check_branch
      %210 = sbr.rel (0) target = $region33
    $region32: #{tpu_custom_call.1} parent=1 // pred_region
      _
    $region33: #{tpu_custom_call.1} parent=1 // pred_fallthru
      _
    // Predicated region
    $region34: #{tpu_custom_call.1} parent=1 // pred_check
      _
    $region35: #{tpu_custom_call.1} parent=1 // pred_check_branch
      %212 = sbr.rel (0) target = $region37
    $region36: #{tpu_custom_call.1} parent=1 // pred_region
      _
    $region37: #{tpu_custom_call.1} parent=1 // pred_fallthru
      _
    // Predicated region
    $region38: #{tpu_custom_call.1} parent=1 // pred_check
      _
    $region39: #{tpu_custom_call.1} parent=1 // pred_check_branch
      %214 = sbr.rel (0) target = $region41
    $region40: #{tpu_custom_call.1} parent=1 // pred_region
      %215 = dma.done [#allocation3], 16
    $region41: #{tpu_custom_call.1} parent=1 // pred_fallthru
      _
    %216 = vsyncpa [#allocation3], 1

</llo_original>
